<compile_context>
chip_gen: v5e
topology: v5e:2x2
jax: 0.10.0
libtpu: 0.0.40
codegen_flags: <defaults>
</compile_context>

<pallas_src>
import functools
import math

import jax
import jax.numpy as jnp
from jax import lax
from jax.experimental import pallas as pl
from jax.experimental.pallas import tpu as pltpu


# ----------------------------------------------------------------------------
# Small helpers shared by kernels and the pure-JAX reference.
# ----------------------------------------------------------------------------
def _gelu(x):
    c = math.sqrt(2.0 / math.pi)
    return 0.5 * x * (1.0 + jnp.tanh(c * (x + 0.044715 * x * x * x)))


def _layer_norm(x, gamma, beta, eps):
    mean = jnp.mean(x, axis=-1, keepdims=True)
    var = jnp.mean(jnp.square(x - mean), axis=-1, keepdims=True)
    return gamma * ((x - mean) * lax.rsqrt(var + eps)) + beta


def _largest_divisor(dim, candidates):
    for c in candidates:
        if c <= dim and dim % c == 0:
            return c
    return dim


# ----------------------------------------------------------------------------
# Embeddings kernel (token + position + token-type embeddings, LayerNorm).
# ----------------------------------------------------------------------------
def _bert_embeddings_kernel(
    ids_ref,        # (B*S,) int32 token ids (SMEM, scalar-prefetched)
    tok_hbm,        # (vocab, H) f32, raw HBM ref (memory_space=pl.ANY)
    pos_ref,        # (TB, H) f32 VMEM tile of the position table
    tt_ref,         # (TB, 1) int32 token-type ids for this tile
    typ_ref,        # (T, H) f32 resident token-type table
    gamma_ref,      # (1, H) f32 LayerNorm weight
    beta_ref,       # (1, H) f32 LayerNorm bias
    o_ref,          # (TB, H) f32 output tile
    tok_buf,        # (2, TB, H) f32 VMEM gather buffer (double-buffered)
    sems,           # (2, TB) DMA semaphores
    *,
    seq_len,
    eps,
):
    b = pl.program_id(0)
    s = pl.program_id(1)
    n_s = pl.num_programs(1)
    tb = tok_buf.shape[1]

    def start_gather(s_idx, slot):
        base = b * seq_len + s_idx * tb

        def body(r, carry):
            tok_id = ids_ref[base + r]
            pltpu.make_async_copy(
                tok_hbm.at[tok_id], tok_buf.at[slot, r], sems.at[slot, r]
            ).start()
            return carry

        lax.fori_loop(0, tb, body, 0)

    def wait_gather(slot):
        def body(r, carry):
            pltpu.make_async_copy(
                tok_hbm.at[0], tok_buf.at[slot, r], sems.at[slot, r]
            ).wait()
            return carry

        lax.fori_loop(0, tb, body, 0)

    slot = s % 2

    @pl.when(s == 0)
    def _prime():
        start_gather(0, 0)

    @pl.when(s + 1 < n_s)
    def _prefetch():
        start_gather(s + 1, 1 - slot)

    wait_gather(slot)

    # Token-type embedding: masked sum over the tiny resident table (T == 2).
    tt = tt_ref[...]                                    # (TB, 1) int32
    typ_rows = typ_ref[...]                             # (T, H)
    typ_contrib = (tt == 0).astype(jnp.float32) * typ_rows[0]
    for t in range(1, typ_ref.shape[0]):
        typ_contrib = typ_contrib + (tt == t).astype(jnp.float32) * typ_rows[t]

    x = tok_buf[slot] + pos_ref[...] + typ_contrib      # (TB, H) f32
    o_ref[...] = _layer_norm(x, gamma_ref[...], beta_ref[...], eps)
    # Dropout: inference-mode identity.


def _pick_block_tokens(seq_len, max_block_tokens):
    """Largest multiple of 8 that divides seq_len and is <= max_block_tokens."""
    if seq_len % 8 != 0:
        raise ValueError("seq_len must be a multiple of 8")
    best = 8
    cand = 8
    limit = min(seq_len, max(8, max_block_tokens))
    while cand <= limit:
        if seq_len % cand == 0:
            best = cand
        cand += 8
    return best


def bert_embeddings(input_ids, token_type_ids, token_emb, pos_emb, type_emb,
                    ln_weight, ln_bias, *, eps=1e-7, block_tokens=128):
    B, S = input_ids.shape
    H = token_emb.shape[1]
    T = type_emb.shape[0]

    tb = _pick_block_tokens(S, block_tokens)
    n_s = S // tb

    ids_flat = input_ids.reshape(B * S).astype(jnp.int32)
    tt3 = token_type_ids.reshape(B, S, 1).astype(jnp.int32)
    gamma2d = ln_weight.reshape(1, H).astype(jnp.float32)
    beta2d = ln_bias.reshape(1, H).astype(jnp.float32)

    # index_maps receive (b, s, ids_ref) because num_scalar_prefetch=1.
    tok_spec = pl.BlockSpec(memory_space=pl.ANY)
    pos_spec = pl.BlockSpec((tb, H), lambda b, s, ids: (s, 0))
    tt_spec = pl.BlockSpec((None, tb, 1), lambda b, s, ids: (b, s, 0))
    typ_spec = pl.BlockSpec((T, H), lambda b, s, ids: (0, 0))
    prm_spec = pl.BlockSpec((1, H), lambda b, s, ids: (0, 0))
    out_spec = pl.BlockSpec((None, tb, H), lambda b, s, ids: (b, s, 0))

    kernel = functools.partial(_bert_embeddings_kernel, seq_len=S, eps=eps)

    return pl.pallas_call(
        kernel,
        out_shape=jax.ShapeDtypeStruct((B, S, H), jnp.float32),
        grid_spec=pltpu.PrefetchScalarGridSpec(
            num_scalar_prefetch=1,
            grid=(B, n_s),
            in_specs=[tok_spec, pos_spec, tt_spec, typ_spec, prm_spec, prm_spec],
            out_specs=out_spec,
            scratch_shapes=[
                pltpu.VMEM((2, tb, H), jnp.float32),
                pltpu.SemaphoreType.DMA((2, tb)),
            ],
        ),
        compiler_params=pltpu.CompilerParams(
            dimension_semantics=("parallel", "arbitrary"),
        ),
    )(ids_flat,
      token_emb.astype(jnp.float32),
      pos_emb.astype(jnp.float32),
      tt3,
      type_emb.astype(jnp.float32),
      gamma2d,
      beta2d)


# ----------------------------------------------------------------------------
# Tiled matmul + bias (+ optional activation) kernel.
# ----------------------------------------------------------------------------
def _linear_kernel(x_ref, w_ref, b_ref, o_ref, acc_ref, *, activation):
    k = pl.program_id(2)

    @pl.when(k == 0)
    def _init():
        acc_ref[...] = jnp.zeros_like(acc_ref)

    acc_ref[...] += jnp.dot(x_ref[...], w_ref[...],
                            preferred_element_type=jnp.float32)

    @pl.when(k == pl.num_programs(2) - 1)
    def _finalize():
        y = acc_ref[...] + b_ref[...]
        if activation == "gelu":
            y = _gelu(y)
        elif activation == "tanh":
            y = jnp.tanh(y)
        o_ref[...] = y.astype(o_ref.dtype)


def linear(x, w, b, *, activation="none"):
    M, K = x.shape
    Kw, N = w.shape
    assert K == Kw
    tm = _largest_divisor(M, (512, 256, 128, 64, 32, 16, 8))
    tn = _largest_divisor(N, (512, 256, 128))
    tk = _largest_divisor(K, (512, 256, 128))

    kernel = functools.partial(_linear_kernel, activation=activation)
    return pl.pallas_call(
        kernel,
        out_shape=jax.ShapeDtypeStruct((M, N), jnp.float32),
        grid_spec=pltpu.PrefetchScalarGridSpec(
            num_scalar_prefetch=0,
            grid=(M // tm, N // tn, K // tk),
            in_specs=[
                pl.BlockSpec((tm, tk), lambda i, j, k: (i, k)),
                pl.BlockSpec((tk, tn), lambda i, j, k: (k, j)),
                pl.BlockSpec((1, tn), lambda i, j, k: (0, j)),
            ],
            out_specs=pl.BlockSpec((tm, tn), lambda i, j, k: (i, j)),
            scratch_shapes=[pltpu.VMEM((tm, tn), jnp.float32)],
        ),
        compiler_params=pltpu.CompilerParams(
            dimension_semantics=("parallel", "parallel", "arbitrary"),
        ),
    )(x.astype(jnp.float32), w.astype(jnp.float32),
      b.reshape(1, N).astype(jnp.float32))


# ----------------------------------------------------------------------------
# Multi-head attention kernel (per-batch grid step, all heads at once).
# ----------------------------------------------------------------------------
def _mha_kernel(q_ref, k_ref, v_ref, mask_ref, o_ref, *, scale):
    q = q_ref[...]                                       # (nH, S, dk)
    k = k_ref[...]
    v = v_ref[...]
    s = jnp.einsum("hqd,hkd->hqk", q, k,
                   preferred_element_type=jnp.float32) * scale
    keep = (mask_ref[...] != 0)[None, :, :]              # (1, 1, S) -> broadcast
    s = jnp.where(keep, s, -1e30)
    m = jnp.max(s, axis=-1, keepdims=True)
    p = jnp.exp(s - m)
    denom = jnp.sum(p, axis=-1, keepdims=True)
    o = jnp.einsum("hqk,hkd->hqd", p, v,
                   preferred_element_type=jnp.float32)
    o_ref[...] = (o / denom).astype(o_ref.dtype)
    # Attention dropout: inference-mode identity.


def multi_head_attention(q, k, v, key_mask):
    B, nH, S, dk = q.shape
    scale = 1.0 / math.sqrt(dk)
    kernel = functools.partial(_mha_kernel, scale=scale)
    qkv_spec = pl.BlockSpec((None, nH, S, dk), lambda b: (b, 0, 0, 0))
    return pl.pallas_call(
        kernel,
        out_shape=jax.ShapeDtypeStruct((B, nH, S, dk), jnp.float32),
        grid_spec=pltpu.PrefetchScalarGridSpec(
            num_scalar_prefetch=0,
            grid=(B,),
            in_specs=[qkv_spec, qkv_spec, qkv_spec,
                      pl.BlockSpec((None, 1, S), lambda b: (b, 0, 0))],
            out_specs=pl.BlockSpec((None, nH, S, dk), lambda b: (b, 0, 0, 0)),
        ),
        compiler_params=pltpu.CompilerParams(dimension_semantics=("parallel",)),
    )(q.astype(jnp.float32), k.astype(jnp.float32), v.astype(jnp.float32),
      key_mask.astype(jnp.int32))


# ----------------------------------------------------------------------------
# (residual add +) LayerNorm kernels.
# ----------------------------------------------------------------------------
def _add_ln_kernel(x_ref, r_ref, g_ref, b_ref, o_ref, *, eps):
    x = x_ref[...] + r_ref[...]
    o_ref[...] = _layer_norm(x, g_ref[...], b_ref[...], eps)


def _ln_kernel(x_ref, g_ref, b_ref, o_ref, *, eps):
    o_ref[...] = _layer_norm(x_ref[...], g_ref[...], b_ref[...], eps)


def _ln_call(kernel_fn, arrays, M, H):
    tm = _largest_divisor(M, (1024, 512, 256, 128, 64, 32, 16, 8))
    row_spec = pl.BlockSpec((tm, H), lambda i: (i, 0))
    prm_spec = pl.BlockSpec((1, H), lambda i: (0, 0))
    n_rows = len(arrays) - 2
    return pl.pallas_call(
        kernel_fn,
        out_shape=jax.ShapeDtypeStruct((M, H), jnp.float32),
        grid_spec=pltpu.PrefetchScalarGridSpec(
            num_scalar_prefetch=0,
            grid=(M // tm,),
            in_specs=[row_spec] * n_rows + [prm_spec, prm_spec],
            out_specs=row_spec,
        ),
        compiler_params=pltpu.CompilerParams(dimension_semantics=("parallel",)),
    )(*arrays)


def add_layer_norm(x, res, gamma, beta, *, eps):
    M, H = x.shape
    kernel = functools.partial(_add_ln_kernel, eps=eps)
    return _ln_call(kernel,
                    (x.astype(jnp.float32), res.astype(jnp.float32),
                     gamma.reshape(1, H).astype(jnp.float32),
                     beta.reshape(1, H).astype(jnp.float32)), M, H)


def layer_norm(x, gamma, beta, *, eps):
    M, H = x.shape
    kernel = functools.partial(_ln_kernel, eps=eps)
    return _ln_call(kernel,
                    (x.astype(jnp.float32),
                     gamma.reshape(1, H).astype(jnp.float32),
                     beta.reshape(1, H).astype(jnp.float32)), M, H)


# ----------------------------------------------------------------------------
# Full BertForPretraining forward (inference mode; labels=None path).
# ----------------------------------------------------------------------------
def bert_for_pretraining(params, input_ids, token_type_ids, input_mask, *,
                         num_heads, eps=1e-7, block_tokens=8):
    B, S = input_ids.shape
    H = params["token_emb"].shape[1]
    d_k = H // num_heads

    x = bert_embeddings(input_ids, token_type_ids,
                        params["token_emb"], params["pos_emb"],
                        params["type_emb"], params["emb_ln_w"],
                        params["emb_ln_b"], eps=eps, block_tokens=block_tokens)
    xf = x.reshape(B * S, H)

    key_mask = input_mask.astype(jnp.int32).reshape(B, 1, S)

    for lp in params["layers"]:
        # Multi-head self-attention block.
        qkv = linear(xf, lp["w_qkv"], lp["b_qkv"])                 # (B*S, 3H)
        qkv = qkv.reshape(B, S, 3, num_heads, d_k)
        q = qkv[:, :, 0].transpose(0, 2, 1, 3)                     # (B, nH, S, dk)
        k = qkv[:, :, 1].transpose(0, 2, 1, 3)
        v = qkv[:, :, 2].transpose(0, 2, 1, 3)
        attn = multi_head_attention(q, k, v, key_mask)             # (B, nH, S, dk)
        attn = attn.transpose(0, 2, 1, 3).reshape(B * S, H)
        attn = linear(attn, lp["w_o"], lp["b_o"])
        xf = add_layer_norm(attn, xf, lp["attn_ln_w"], lp["attn_ln_b"], eps=eps)

        # Feed-forward block.
        h = linear(xf, lp["w_ff1"], lp["b_ff1"], activation="gelu")
        h = linear(h, lp["w_ff2"], lp["b_ff2"])
        xf = add_layer_norm(h, xf, lp["ff_ln_w"], lp["ff_ln_b"], eps=eps)

    encoder_output = xf.reshape(B, S, H)

    # Pooler (dropout = identity).
    cls = encoder_output[:, 0, :]
    pooled = linear(cls, params["w_pool"], params["b_pool"], activation="tanh")

    # LM head: transform (linear + gelu + layernorm) then decoder tied to token_emb.
    t = linear(xf, params["w_lm"], params["b_lm"], activation="gelu")
    t = layer_norm(t, params["lm_ln_w"], params["lm_ln_b"], eps=eps)
    lm_logits = linear(t, params["token_emb"].T, params["lm_bias"])
    lm_logits = lm_logits.reshape(B, S, -1)

    # NSP head.
    nsp_logits = linear(pooled, params["w_nsp"], params["b_nsp"])

    return encoder_output, pooled, lm_logits, nsp_logits


# ----------------------------------------------------------------------------
# Pure-JAX reference (mirrors the PyTorch module's forward, inference mode).
# ----------------------------------------------------------------------------
def _ref_ln(x, w, b, eps):
    mean = x.mean(-1, keepdims=True)
    var = ((x - mean) ** 2).mean(-1, keepdims=True)
    return w * ((x - mean) / jnp.sqrt(var + eps)) + b


def reference_forward(params, input_ids, token_type_ids, input_mask, *,
                      num_heads, eps=1e-7):
    B, S = input_ids.shape
    H = params["token_emb"].shape[1]
    d_k = H // num_heads

    positions = jnp.arange(S)
    x = (params["token_emb"][input_ids]
         + params["pos_emb"][positions][None, :, :]
         + params["type_emb"][token_type_ids])
    x = _ref_ln(x, params["emb_ln_w"], params["emb_ln_b"], eps)

    mask4 = input_mask.astype(bool)[:, None, None, :]
    for lp in params["layers"]:
        qkv = x @ lp["w_qkv"] + lp["b_qkv"]
        q, k, v = jnp.split(qkv, 3, axis=-1)
        q = q.reshape(B, S, num_heads, d_k).transpose(0, 2, 1, 3)
        k = k.reshape(B, S, num_heads, d_k).transpose(0, 2, 1, 3)
        v = v.reshape(B, S, num_heads, d_k).transpose(0, 2, 1, 3)
        s = (q @ k.transpose(0, 1, 3, 2)) / math.sqrt(d_k)
        s = jnp.where(mask4, s, -1e30)
        p = jax.nn.softmax(s, axis=-1)
        y = (p @ v).transpose(0, 2, 1, 3).reshape(B, S, H)
        y = y @ lp["w_o"] + lp["b_o"]
        x = _ref_ln(x + y, lp["attn_ln_w"], lp["attn_ln_b"], eps)
        h = _gelu(x @ lp["w_ff1"] + lp["b_ff1"])
        h = h @ lp["w_ff2"] + lp["b_ff2"]
        x = _ref_ln(x + h, lp["ff_ln_w"], lp["ff_ln_b"], eps)

    pooled = jnp.tanh(x[:, 0, :] @ params["w_pool"] + params["b_pool"])
    t = _gelu(x @ params["w_lm"] + params["b_lm"])
    t = _ref_ln(t, params["lm_ln_w"], params["lm_ln_b"], eps)
    lm_logits = t @ params["token_emb"].T + params["lm_bias"]
    nsp_logits = pooled @ params["w_nsp"] + params["b_nsp"]
    return x, pooled, lm_logits, nsp_logits


# ----------------------------------------------------------------------------
# Self-contained test.
# ----------------------------------------------------------------------------
if __name__ == "__main__":
    # Small config consistent with BertConfig fields.
    vocab_size = 256
    type_vocab_size = 2
    hidden_size = 128
    num_hidden_layers = 2
    num_heads = 4
    intermediate_size = 256
    max_seq_length = 64
    batch = 2
    seq = 16
    eps = 1e-7

    kit = iter(jax.random.split(jax.random.PRNGKey(0), 64))

    def nrm(shape, std=0.02):
        return std * jax.random.normal(next(kit), shape, jnp.float32)

    H, I, V, T = hidden_size, intermediate_size, vocab_size, type_vocab_size
    ones_h = jnp.ones((H,), jnp.float32)
    zeros_h = jnp.zeros((H,), jnp.float32)

    layers = []
    for _ in range(num_hidden_layers):
        layers.append(dict(
            w_qkv=nrm((H, 3 * H)), b_qkv=jnp.zeros((3 * H,), jnp.float32),
            w_o=nrm((H, H)), b_o=zeros_h,
            attn_ln_w=ones_h, attn_ln_b=zeros_h,
            w_ff1=nrm((H, I)), b_ff1=jnp.zeros((I,), jnp.float32),
            w_ff2=nrm((I, H)), b_ff2=zeros_h,
            ff_ln_w=ones_h, ff_ln_b=zeros_h,
        ))

    params = dict(
        token_emb=nrm((V, H)),
        pos_emb=nrm((max_seq_length, H)),
        type_emb=nrm((T, H)),
        emb_ln_w=ones_h, emb_ln_b=zeros_h,
        layers=layers,
        w_pool=nrm((H, H)), b_pool=zeros_h,
        w_lm=nrm((H, H)), b_lm=zeros_h,
        lm_ln_w=ones_h, lm_ln_b=zeros_h,
        lm_bias=jnp.zeros((V,), jnp.float32),
        w_nsp=nrm((H, 2)), b_nsp=jnp.zeros((2,), jnp.float32),
    )

    input_ids = jax.random.randint(next(kit), (batch, seq), 0, V, dtype=jnp.int32)
    token_type_ids = jax.random.randint(next(kit), (batch, seq), 0, T,
                                        dtype=jnp.int32)
    # Second sequence padded on the last 4 tokens.
    input_mask = jnp.ones((batch, seq), jnp.int32).at[1, -4:].set(0)

    enc, pooled, lm_logits, nsp_logits = bert_for_pretraining(
        params, input_ids, token_type_ids, input_mask,
        num_heads=num_heads, eps=eps, block_tokens=8)
    enc = jax.block_until_ready(enc)
    pooled = jax.block_until_ready(pooled)
    lm_logits = jax.block_until_ready(lm_logits)
    nsp_logits = jax.block_until_ready(nsp_logits)

    ref_enc, ref_pooled, ref_lm, ref_nsp = reference_forward(
        params, input_ids, token_type_ids, input_mask,
        num_heads=num_heads, eps=eps)

    assert enc.shape == (batch, seq, hidden_size)
    assert pooled.shape == (batch, hidden_size)
    assert lm_logits.shape == (batch, seq, vocab_size)
    assert nsp_logits.shape == (batch, 2)

    assert jnp.allclose(enc, ref_enc, atol=2e-3, rtol=2e-3)
    assert jnp.allclose(pooled, ref_pooled, atol=2e-3, rtol=2e-3)
    assert jnp.allclose(lm_logits, ref_lm, atol=2e-3, rtol=2e-3)
    assert jnp.allclose(nsp_logits, ref_nsp, atol=2e-3, rtol=2e-3)

    print("KERNEL_OK")
</pallas_src>

<mosaic_0001>
module attributes {stable_mosaic.version = 11 : i64} {
  func.func @_bert_embeddings_kernel(%arg0: i32, %arg1: i32, %arg2: memref<32xi32, #tpu.memory_space<smem>>, %arg3: memref<256x128xf32, #tpu.memory_space<any>>, %arg4: memref<8x128xf32, #tpu.memory_space<vmem>>, %arg5: memref<1x8x1xi32, #tpu.memory_space<vmem>>, %arg6: memref<2x128xf32, #tpu.memory_space<vmem>>, %arg7: memref<1x128xf32, #tpu.memory_space<vmem>>, %arg8: memref<1x128xf32, #tpu.memory_space<vmem>>, %arg9: memref<1x8x128xf32, #tpu.memory_space<vmem>>, %arg10: memref<2x8x128xf32, #tpu.memory_space<vmem>>, %arg11: memref<2x8x!tpu.dma_semaphore, #tpu.memory_space<semaphore_mem>>) attributes {dimension_semantics = [#tpu.dimension_semantics<parallel>, #tpu.dimension_semantics<arbitrary>], iteration_bounds = array<i64: 2, 2>, scalar_prefetch = 1 : i64, scratch_operands = 2 : i64, tpu.core_type = #tpu.core_type<tc>, window_params = [{}, {transform_indices = @transform_1, window_bounds = array<i64: 8, 128>}, {transform_indices = @transform_2, window_bounds = array<i64: 1, 8, 1>}, {pipeline_mode = #tpu.pipeline_mode<synchronous>, transform_indices = @transform_3, window_bounds = array<i64: 2, 128>}, {pipeline_mode = #tpu.pipeline_mode<synchronous>, transform_indices = @transform_4, window_bounds = array<i64: 1, 128>}, {pipeline_mode = #tpu.pipeline_mode<synchronous>, transform_indices = @transform_5, window_bounds = array<i64: 1, 128>}, {transform_indices = @transform_6, window_bounds = array<i64: 1, 8, 128>}]} {
    %c2_i32 = arith.constant 2 : i32
    %c0_i32 = arith.constant 0 : i32
    %0 = arith.cmpi eq, %c2_i32, %c0_i32 : i32
    %c1_i32 = arith.constant 1 : i32
    %1 = arith.select %0, %c1_i32, %c2_i32 : i32
    %2 = arith.remsi %arg1, %1 : i32
    %c0_i32_0 = arith.constant 0 : i32
    %3 = arith.cmpi ne, %2, %c0_i32_0 : i32
    %c0_i32_1 = arith.constant 0 : i32
    %4 = arith.cmpi slt, %2, %c0_i32_1 : i32
    %c0_i32_2 = arith.constant 0 : i32
    %5 = arith.cmpi slt, %1, %c0_i32_2 : i32
    %6 = arith.xori %4, %5 : i1
    %7 = arith.andi %6, %3 : i1
    %8 = arith.addi %2, %1 : i32
    %9 = arith.select %7, %8, %2 : i32
    %c0_i32_3 = arith.constant 0 : i32
    %10 = arith.cmpi eq, %arg1, %c0_i32_3 : i32
    %11 = arith.extui %10 : i1 to i32
    %c0_i32_4 = arith.constant 0 : i32
    %12 = arith.cmpi ne, %11, %c0_i32_4 : i32
    scf.if %12 {
      %c16_i32 = arith.constant 16 : i32
      %75 = arith.muli %arg0, %c16_i32 : i32
      %c0_i32_32 = arith.constant 0 : i32
      %76 = arith.addi %75, %c0_i32_32 : i32
      %c0_i32_33 = arith.constant 0 : i32
      %c8_i32_34 = arith.constant 8 : i32
      %77 = arith.addi %c0_i32_33, %c8_i32_34 : i32
      %c1_i32_35 = arith.constant 1 : i32
      scf.for %arg12 = %c0_i32_33 to %77 step %c1_i32_35  : i32 {
        %78 = arith.addi %76, %arg12 : i32
        %79 = arith.index_cast %78 : i32 to index
        %80 = memref.load %arg2[%79] : memref<32xi32, #tpu.memory_space<smem>>
        %c0_i32_37 = arith.constant 0 : i32
        %c0_i32_38 = arith.constant 0 : i32
        %c0_i32_39 = arith.constant 0 : i32
        %81 = tpu.memref_slice %arg3[%80, %c0_i32_39] : memref<256x128xf32, #tpu.memory_space<any>> -> memref<1x128xf32, #tpu.memory_space<any>>
        %82 = tpu.memref_squeeze %81 : memref<1x128xf32, #tpu.memory_space<any>> -> memref<128xf32, #tpu.memory_space<any>>
        %c0_i32_40 = arith.constant 0 : i32
        %83 = tpu.memref_slice %arg10[%c0_i32_37, %arg12, %c0_i32_40] : memref<2x8x128xf32, #tpu.memory_space<vmem>> -> memref<1x1x128xf32, #tpu.memory_space<vmem>>
        %84 = tpu.memref_squeeze %83 : memref<1x1x128xf32, #tpu.memory_space<vmem>> -> memref<128xf32, #tpu.memory_space<vmem>>
        %85 = tpu.memref_slice %arg11[%c0_i32_38, %arg12] : memref<2x8x!tpu.dma_semaphore, #tpu.memory_space<semaphore_mem>> -> memref<1x1x!tpu.dma_semaphore, #tpu.memory_space<semaphore_mem>>
        %86 = tpu.memref_squeeze %85 : memref<1x1x!tpu.dma_semaphore, #tpu.memory_space<semaphore_mem>> -> memref<!tpu.dma_semaphore, #tpu.memory_space<semaphore_mem>>
        tpu.enqueue_dma source(%82 : memref<128xf32, #tpu.memory_space<any>>) target(%84 : memref<128xf32, #tpu.memory_space<vmem>>) target_semaphore(%86 : memref<!tpu.dma_semaphore, #tpu.memory_space<semaphore_mem>>)
      }
      %c8_i32_36 = arith.constant 8 : i32
    } else {
    }
    %c1_i32_5 = arith.constant 1 : i32
    %13 = arith.addi %arg1, %c1_i32_5 : i32
    %c2_i32_6 = arith.constant 2 : i32
    %14 = arith.cmpi slt, %13, %c2_i32_6 : i32
    %15 = arith.extui %14 : i1 to i32
    %c0_i32_7 = arith.constant 0 : i32
    %16 = arith.cmpi ne, %15, %c0_i32_7 : i32
    scf.if %16 {
      %c1_i32_32 = arith.constant 1 : i32
      %75 = arith.addi %arg1, %c1_i32_32 : i32
      %c1_i32_33 = arith.constant 1 : i32
      %76 = arith.subi %c1_i32_33, %9 : i32
      %c16_i32 = arith.constant 16 : i32
      %77 = arith.muli %arg0, %c16_i32 : i32
      %c8_i32_34 = arith.constant 8 : i32
      %78 = arith.muli %75, %c8_i32_34 : i32
      %79 = arith.addi %77, %78 : i32
      %c0_i32_35 = arith.constant 0 : i32
      %c8_i32_36 = arith.constant 8 : i32
      %80 = arith.addi %c0_i32_35, %c8_i32_36 : i32
      %c1_i32_37 = arith.constant 1 : i32
      scf.for %arg12 = %c0_i32_35 to %80 step %c1_i32_37  : i32 {
        %81 = arith.addi %79, %arg12 : i32
        %82 = arith.index_cast %81 : i32 to index
        %83 = memref.load %arg2[%82] : memref<32xi32, #tpu.memory_space<smem>>
        %c0_i32_39 = arith.constant 0 : i32
        %84 = tpu.memref_slice %arg3[%83, %c0_i32_39] : memref<256x128xf32, #tpu.memory_space<any>> -> memref<1x128xf32, #tpu.memory_space<any>>
        %85 = tpu.memref_squeeze %84 : memref<1x128xf32, #tpu.memory_space<any>> -> memref<128xf32, #tpu.memory_space<any>>
        %c0_i32_40 = arith.constant 0 : i32
        %86 = tpu.memref_slice %arg10[%76, %arg12, %c0_i32_40] : memref<2x8x128xf32, #tpu.memory_space<vmem>> -> memref<1x1x128xf32, #tpu.memory_space<vmem>>
        %87 = tpu.memref_squeeze %86 : memref<1x1x128xf32, #tpu.memory_space<vmem>> -> memref<128xf32, #tpu.memory_space<vmem>>
        %88 = tpu.memref_slice %arg11[%76, %arg12] : memref<2x8x!tpu.dma_semaphore, #tpu.memory_space<semaphore_mem>> -> memref<1x1x!tpu.dma_semaphore, #tpu.memory_space<semaphore_mem>>
        %89 = tpu.memref_squeeze %88 : memref<1x1x!tpu.dma_semaphore, #tpu.memory_space<semaphore_mem>> -> memref<!tpu.dma_semaphore, #tpu.memory_space<semaphore_mem>>
        tpu.enqueue_dma source(%85 : memref<128xf32, #tpu.memory_space<any>>) target(%87 : memref<128xf32, #tpu.memory_space<vmem>>) target_semaphore(%89 : memref<!tpu.dma_semaphore, #tpu.memory_space<semaphore_mem>>)
      }
      %c8_i32_38 = arith.constant 8 : i32
    } else {
    }
    %c0_i32_8 = arith.constant 0 : i32
    %c8_i32 = arith.constant 8 : i32
    %17 = arith.addi %c0_i32_8, %c8_i32 : i32
    %c1_i32_9 = arith.constant 1 : i32
    scf.for %arg12 = %c0_i32_8 to %17 step %c1_i32_9  : i32 {
      %c0_i32_32 = arith.constant 0 : i32
      %c0_i32_33 = arith.constant 0 : i32
      %75 = tpu.memref_slice %arg3[%c0_i32_32, %c0_i32_33] : memref<256x128xf32, #tpu.memory_space<any>> -> memref<1x128xf32, #tpu.memory_space<any>>
      %76 = tpu.memref_squeeze %75 : memref<1x128xf32, #tpu.memory_space<any>> -> memref<128xf32, #tpu.memory_space<any>>
      %c0_i32_34 = arith.constant 0 : i32
      %77 = tpu.memref_slice %arg10[%9, %arg12, %c0_i32_34] : memref<2x8x128xf32, #tpu.memory_space<vmem>> -> memref<1x1x128xf32, #tpu.memory_space<vmem>>
      %78 = tpu.memref_squeeze %77 : memref<1x1x128xf32, #tpu.memory_space<vmem>> -> memref<128xf32, #tpu.memory_space<vmem>>
      %79 = tpu.memref_slice %arg11[%9, %arg12] : memref<2x8x!tpu.dma_semaphore, #tpu.memory_space<semaphore_mem>> -> memref<1x1x!tpu.dma_semaphore, #tpu.memory_space<semaphore_mem>>
      %80 = tpu.memref_squeeze %79 : memref<1x1x!tpu.dma_semaphore, #tpu.memory_space<semaphore_mem>> -> memref<!tpu.dma_semaphore, #tpu.memory_space<semaphore_mem>>
      tpu.wait_dma2 semaphore(%80 : memref<!tpu.dma_semaphore, #tpu.memory_space<semaphore_mem>>) src(%76 : memref<128xf32, #tpu.memory_space<any>>) dst(%78 : memref<128xf32, #tpu.memory_space<vmem>>)
    }
    %c8_i32_10 = arith.constant 8 : i32
    %c0 = arith.constant 0 : index
    %c0_11 = arith.constant 0 : index
    %c0_12 = arith.constant 0 : index
    %18 = vector.load %arg5[%c0, %c0_11, %c0_12] : memref<1x8x1xi32, #tpu.memory_space<vmem>>, vector<1x8x1xi32>
    %19 = vector.shape_cast %18 : vector<1x8x1xi32> to vector<8x1xi32>
    %c0_13 = arith.constant 0 : index
    %c0_14 = arith.constant 0 : index
    %20 = vector.load %arg6[%c0_13, %c0_14] : memref<2x128xf32, #tpu.memory_space<vmem>>, vector<2x128xf32>
    %c0_i32_15 = arith.constant 0 : i32
    %21 = vector.broadcast %c0_i32_15 : i32 to vector<8x1xi32>
    %22 = arith.cmpi eq, %19, %21 : vector<8x1xi32>
    %23 = arith.extui %22 : vector<8x1xi1> to vector<8x1xi32>
    %24 = arith.sitofp %23 : vector<8x1xi32> to vector<8x1xf32>
    %25 = vector.extract_strided_slice %20 {offsets = [0, 0], sizes = [1, 128], strides = [1, 1]} : vector<2x128xf32> to vector<1x128xf32>
    %26 = vector.shape_cast %25 : vector<1x128xf32> to vector<128xf32>
    %27 = vector.shape_cast %26 : vector<128xf32> to vector<1x128xf32>
    %28 = vector.broadcast %24 : vector<8x1xf32> to vector<8x128xf32>
    %29 = vector.broadcast %27 : vector<1x128xf32> to vector<8x128xf32>
    %30 = arith.mulf %28, %29 : vector<8x128xf32>
    %c1_i32_16 = arith.constant 1 : i32
    %31 = vector.broadcast %c1_i32_16 : i32 to vector<8x1xi32>
    %32 = arith.cmpi eq, %19, %31 : vector<8x1xi32>
    %33 = arith.extui %32 : vector<8x1xi1> to vector<8x1xi32>
    %34 = arith.sitofp %33 : vector<8x1xi32> to vector<8x1xf32>
    %35 = vector.extract_strided_slice %20 {offsets = [1, 0], sizes = [1, 128], strides = [1, 1]} : vector<2x128xf32> to vector<1x128xf32>
    %36 = vector.shape_cast %35 : vector<1x128xf32> to vector<128xf32>
    %37 = vector.shape_cast %36 : vector<128xf32> to vector<1x128xf32>
    %38 = vector.broadcast %34 : vector<8x1xf32> to vector<8x128xf32>
    %39 = vector.broadcast %37 : vector<1x128xf32> to vector<8x128xf32>
    %40 = arith.mulf %38, %39 : vector<8x128xf32>
    %41 = arith.addf %30, %40 : vector<8x128xf32>
    %42 = arith.index_cast %9 : i32 to index
    %c0_17 = arith.constant 0 : index
    %c0_18 = arith.constant 0 : index
    %43 = vector.load %arg10[%42, %c0_17, %c0_18] : memref<2x8x128xf32, #tpu.memory_space<vmem>>, vector<1x8x128xf32>
    %44 = vector.shape_cast %43 : vector<1x8x128xf32> to vector<8x128xf32>
    %c0_19 = arith.constant 0 : index
    %c0_20 = arith.constant 0 : index
    %45 = vector.load %arg4[%c0_19, %c0_20] : memref<8x128xf32, #tpu.memory_space<vmem>>, vector<8x128xf32>
    %46 = arith.addf %44, %45 : vector<8x128xf32>
    %47 = arith.addf %46, %41 : vector<8x128xf32>
    %c0_21 = arith.constant 0 : index
    %c0_22 = arith.constant 0 : index
    %48 = vector.load %arg7[%c0_21, %c0_22] : memref<1x128xf32, #tpu.memory_space<vmem>>, vector<1x128xf32>
    %c0_23 = arith.constant 0 : index
    %c0_24 = arith.constant 0 : index
    %49 = vector.load %arg8[%c0_23, %c0_24] : memref<1x128xf32, #tpu.memory_space<vmem>>, vector<1x128xf32>
    %cst = arith.constant dense<0.000000e+00> : vector<8xf32>
    %50 = vector.multi_reduction <add>, %47, %cst [1] : vector<8x128xf32> to vector<8xf32>
    %51 = vector.shape_cast %50 : vector<8xf32> to vector<8x1xf32>
    %cst_25 = arith.constant 1.280000e+02 : f32
    %52 = vector.broadcast %cst_25 : f32 to vector<8x1xf32>
    %53 = arith.divf %51, %52 : vector<8x1xf32>
    %54 = vector.broadcast %53 : vector<8x1xf32> to vector<8x128xf32>
    %55 = arith.subf %47, %54 : vector<8x128xf32>
    %56 = arith.mulf %55, %55 : vector<8x128xf32>
    %cst_26 = arith.constant dense<0.000000e+00> : vector<8xf32>
    %57 = vector.multi_reduction <add>, %56, %cst_26 [1] : vector<8x128xf32> to vector<8xf32>
    %58 = vector.shape_cast %57 : vector<8xf32> to vector<8x1xf32>
    %cst_27 = arith.constant 1.280000e+02 : f32
    %59 = vector.broadcast %cst_27 : f32 to vector<8x1xf32>
    %60 = arith.divf %58, %59 : vector<8x1xf32>
    %61 = vector.broadcast %53 : vector<8x1xf32> to vector<8x128xf32>
    %62 = arith.subf %47, %61 : vector<8x128xf32>
    %cst_28 = arith.constant 1.000000e-07 : f32
    %63 = vector.broadcast %cst_28 : f32 to vector<8x1xf32>
    %64 = arith.addf %60, %63 : vector<8x1xf32>
    %65 = math.rsqrt %64 : vector<8x1xf32>
    %66 = vector.broadcast %65 : vector<8x1xf32> to vector<8x128xf32>
    %67 = arith.mulf %62, %66 : vector<8x128xf32>
    %68 = vector.broadcast %48 : vector<1x128xf32> to vector<8x128xf32>
    %69 = arith.mulf %68, %67 : vector<8x128xf32>
    %70 = vector.broadcast %49 : vector<1x128xf32> to vector<8x128xf32>
    %71 = arith.addf %69, %70 : vector<8x128xf32>
    %c0_29 = arith.constant 0 : index
    %c0_30 = arith.constant 0 : index
    %c0_31 = arith.constant 0 : index
    %72 = vector.load %arg9[%c0_29, %c0_30, %c0_31] : memref<1x8x128xf32, #tpu.memory_space<vmem>>, vector<1x8x128xf32>
    %73 = vector.shape_cast %72 : vector<1x8x128xf32> to vector<8x128xf32>
    %74 = vector.shape_cast %71 : vector<8x128xf32> to vector<1x8x128xf32>
    tpu.vector_store %arg9[%c0_29, %c0_30, %c0_31], %74 {strides = array<i32>} : memref<1x8x128xf32, #tpu.memory_space<vmem>>, vector<1x8x128xf32>,
    return
  }
  func.func @transform_1(%arg0: i32, %arg1: i32, %arg2: memref<32xi32, #tpu.memory_space<smem>>) -> (i32, i32) {
    %c0_i32 = arith.constant 0 : i32
    %c0_i32_0 = arith.constant 0 : i32
    return %arg1, %c0_i32 : i32, i32
  }
  func.func @transform_2(%arg0: i32, %arg1: i32, %arg2: memref<32xi32, #tpu.memory_space<smem>>) -> (i32, i32, i32) {
    %c0_i32 = arith.constant 0 : i32
    %c0_i32_0 = arith.constant 0 : i32
    return %arg0, %arg1, %c0_i32 : i32, i32, i32
  }
  func.func @transform_3(%arg0: i32, %arg1: i32, %arg2: memref<32xi32, #tpu.memory_space<smem>>) -> (i32, i32) {
    %c0_i32 = arith.constant 0 : i32
    %c0_i32_0 = arith.constant 0 : i32
    %c0_i32_1 = arith.constant 0 : i32
    return %c0_i32, %c0_i32_0 : i32, i32
  }
  func.func @transform_4(%arg0: i32, %arg1: i32, %arg2: memref<32xi32, #tpu.memory_space<smem>>) -> (i32, i32) {
    %c0_i32 = arith.constant 0 : i32
    %c0_i32_0 = arith.constant 0 : i32
    %c0_i32_1 = arith.constant 0 : i32
    return %c0_i32, %c0_i32_0 : i32, i32
  }
  func.func @transform_5(%arg0: i32, %arg1: i32, %arg2: memref<32xi32, #tpu.memory_space<smem>>) -> (i32, i32) {
    %c0_i32 = arith.constant 0 : i32
    %c0_i32_0 = arith.constant 0 : i32
    %c0_i32_1 = arith.constant 0 : i32
    return %c0_i32, %c0_i32_0 : i32, i32
  }
  func.func @transform_6(%arg0: i32, %arg1: i32, %arg2: memref<32xi32, #tpu.memory_space<smem>>) -> (i32, i32, i32) {
    %c0_i32 = arith.constant 0 : i32
    %c0_i32_0 = arith.constant 0 : i32
    return %arg0, %arg1, %c0_i32 : i32, i32, i32
  }
}

</mosaic_0001>

<llo_original>
// kernel: tpu_custom_call.1
$region0: #{tpu_custom_call.1}
  #allocation0 [shape = 'u32[]', space=smem, size = 0x4, offset = 0x4, fixed_abs, tag = 'smem constant byte address 0x4 - core index']
  #allocation1 [shape = 'u32[72,128]{1,0:T(1,128)}', space=vmem, size = 0x9000, scoped, tag = 'internal scratch']
  #allocation2 [shape = 'f32[2,8,128]{2,1,0:T(8,128)}', space=vmem, size = 0x2000, scoped, tag = 'scratch operand']
  #allocation3 [shape = 's32[16]{0}', space=sflag, size = 0x40, scoped, tag = 'scratch operand']
  #allocation4 [shape = 's32[1]{0}', space=sflag, size = 0x4, scoped, tag = 'scoped memory for tpu_custom_call.1']
  #allocation5 [shape = 'u8[512]{0}', space=smem, size = 0x200, scoped, tag = 'prefetched SMEM operand 0']
  #allocation10 [shape = 's32[]', space=sflag, size = 0x4, offset = 0, fixed_abs, tag = 'sflag constant byte address 0x0 - dummy sync flag']
  #allocation11 [shape = 's32[]', space=sflag, size = 0x4, offset = 0, fixed_abs, tag = 'sflag constant byte address 0x0 - dummy sync flag']
  #allocation12 [shape = 'u32[]', space=smem, size = 0x4, offset = 0x44, fixed_abs, tag = 'smem constant byte address 0x44 - assertion arg 0']
  #allocation13 [shape = 'u32[]', space=smem, size = 0x4, offset = 0x48, fixed_abs, tag = 'smem constant byte address 0x48 - assertion arg 1']
  #allocation14 [shape = 's32[]', space=sflag, size = 0x4, offset = 0, fixed_abs, tag = 'sflag constant byte address 0x0 - dummy sync flag']
  #allocation15 [shape = 's32[]', space=sflag, size = 0x4, offset = 0, fixed_abs, tag = 'sflag constant byte address 0x0 - dummy sync flag']
  %s0 = inlined_call_operand.vmem [shape: s32[32], index: 0, kind: input, shape index: {}]
  %s1 = inlined_call_operand.hbm [shape: f32[256,128], index: 1, kind: input, shape index: {}]
  %s2 = inlined_call_operand.hbm [shape: f32[64,128], index: 2, kind: input, shape index: {}]
  %s3 = inlined_call_operand.vmem [shape: s32[2,16,1], index: 3, kind: input, shape index: {}]
  %s4 = inlined_call_operand.vmem [shape: f32[2,128], index: 4, kind: input, shape index: {}]
  %s5 = inlined_call_operand.vmem [shape: f32[1,128], index: 5, kind: input, shape index: {}]
  %s6 = inlined_call_operand.vmem [shape: f32[1,128], index: 6, kind: input, shape index: {}]
  %s7 = inlined_call_operand.hbm [shape: f32[2,16,128], index: 7, kind: output, shape index: {}]
  %s8 = sld [smem:[#allocation0]]
  $region94: #{tpu_custom_call.1} parent=0
    _
  %s10 = ssub.s32 1, %s8
  %s11 = scalar_select 0, %s10, %s8
  %s13 = sshll.u32 %s0, 4
  %s14 = int_to_ptr.vmem [resolvable:$true] %s13
  %16 = dma.vmem_to_smem %s14, 16, [#allocation5], [#allocation4]
  %18 = dma.done [#allocation4], 16
  %19 = sfence
  $region1: #{tpu_custom_call.1} parent=0
    #allocation6 [shape = 'u8[8192]{0}', space=vmem, size = 0x2000, scoped, tag = 'input window, operand 2']
    #allocation7 [shape = 's32[2]{0}', space=sflag, size = 0x8, scoped, tag = 'scoped memory for tpu_custom_call.1']
    #allocation8 [shape = 's32[2]{0}', space=sflag, size = 0x8, scoped, tag = 'scoped memory for tpu_custom_call.1']
    #allocation9 [shape = 'u8[8192]{0}', space=vmem, size = 0x2000, scoped, tag = 'output window, operand 0']
    %20 = vsyncpa [#allocation7], 0
    %s21 = scalar_lea.sflag [#allocation7], 1
    %22 = vsyncpa %s21, 0
    %23 = vsyncpa [#allocation8], 0
    %s24 = scalar_lea.sflag [#allocation8], 1
    %25 = vsyncpa %s24, 0
    loop: start=0, step=1, limit=6
    $region2: #{tpu_custom_call.1} parent=1 // loop_pre_header
      _
    $region3: #{tpu_custom_call.1} parent=1 // loop_header
      %s27 = sphi 0, %s31
      %p28 = scmp.ge.s32.totalorder %s27, 6
      %s34 = sphi 0, %s46
      %s35 = sphi 0, %s42
      %s36 = sphi 0, %s34
      %s37 = sphi 0, %s35
      %s38 = sphi 0, %s36
      %s39 = sphi 0, %s37
      %s49 = sphi 0, %s51
      %s52 = sphi 0, %s49
      %s53 = sphi 0, %s52
      %s69 = sphi 0, %s53
      %s77 = sphi 0, %s79
      %s80 = sphi 0, %s77
      %s81 = sphi 0, %s80
      %s97 = sphi 0, %s81
      %s101 = sphi 0, %s101
      %s103 = sphi 0, %s101
      %s104 = sphi 0, %s103
      %s118 = sphi 0, %s104
      %s122 = sphi 0, %s122
      %s124 = sphi 0, %s122
      %s125 = sphi 0, %s124
      %s139 = sphi 0, %s125
      %s143 = sphi 0, %s143
      %s145 = sphi 0, %s143
      %s146 = sphi 0, %s145
      %s160 = sphi 0, %s146
      %s168 = sphi 0, %s170
      %s171 = sphi 0, %s168
      %s172 = sphi 0, %s171
      %s188 = sphi 0, %s172
    $region4: #{tpu_custom_call.1} parent=1 // loop_header_branch
      %30 = sbr.rel (%p28) target = $region8
    $region5: #{tpu_custom_call.1} parent=1 // loop_body
      %s32 = ssub.s32 %s27, 1
      %s33 = ssub.s32 %s27, 2
      %s40 = sadd.s32 1, %s35
      %p41 = scmp.ge.s32.totalorder %s40, 2
      %s42 = scalar_select %p41, 0, %s40
      %s43 = sadd.s32 1, %s34
      %s44 = scalar_select %p41, %s43, %s34
      %p45 = scmp.ge.s32.totalorder %s44, 2
      %s46 = scalar_select %p45, 0, %s44
      %s47 = ssub.s32 %s35, %s42
      %p48 = scmp.eq.s32.totalorder %s47, 0
      %s50 = sadd.s32 %s49, 1
      %s51 = scalar_select %p48, %s49, %s50
      %p54 = pneg %p48
      %p55 = scmp.eq.s32.totalorder %s27, 3
      %p56 = por %p54, %p55
      %p57 = scmp.ne.s32.totalorder %s49, %s52
      %p58 = scmp.eq.s32.totalorder %s27, 0
      %p59 = por %p57, %p58
      %p60 = scmp.ne.s32.totalorder %s49, %s52
      %p61 = scmp.eq.s32.totalorder %s32, 3
      %p62 = por %p60, %p61
      %p63 = scmp.ne.s32.totalorder %s52, %s53
      %p64 = scmp.eq.s32.totalorder %s32, 0
      %p65 = por %p63, %p64
      %p66 = scmp.ne.s32.totalorder %s52, %s53
      %p67 = scmp.eq.s32.totalorder %s33, 3
      %p68 = por %p66, %p67
      %p70 = scmp.ne.s32.totalorder %s53, %s69
      %p71 = scmp.eq.s32.totalorder %s33, 0
      %p72 = por %p70, %p71
      %s73 = ssub.s32 %s34, %s46
      %s74 = ssub.s32 %s35, %s42
      %s75 = sor.u32 %s73, %s74
      %p76 = scmp.eq.s32.totalorder %s75, 0
      %s78 = sadd.s32 %s77, 1
      %s79 = scalar_select %p76, %s77, %s78
      %p82 = pneg %p76
      %p83 = scmp.eq.s32.totalorder %s27, 3
      %p84 = por %p82, %p83
      %p85 = scmp.ne.s32.totalorder %s77, %s80
      %p86 = scmp.eq.s32.totalorder %s27, 0
      %p87 = por %p85, %p86
      %p88 = scmp.ne.s32.totalorder %s77, %s80
      %p89 = scmp.eq.s32.totalorder %s32, 3
      %p90 = por %p88, %p89
      %p91 = scmp.ne.s32.totalorder %s80, %s81
      %p92 = scmp.eq.s32.totalorder %s32, 0
      %p93 = por %p91, %p92
      %p94 = scmp.ne.s32.totalorder %s80, %s81
      %p95 = scmp.eq.s32.totalorder %s33, 3
      %p96 = por %p94, %p95
      %p98 = scmp.ne.s32.totalorder %s81, %s97
      %p99 = scmp.eq.s32.totalorder %s33, 0
      %p100 = por %p98, %p99
      %s102 = sadd.s32 %s101, 1
      %p105 = scmp.eq.s32.totalorder %s27, 3
      %p106 = scmp.ne.s32.totalorder %s101, %s103
      %p107 = scmp.eq.s32.totalorder %s27, 0
      %p108 = por %p106, %p107
      %p109 = scmp.ne.s32.totalorder %s101, %s103
      %p110 = scmp.eq.s32.totalorder %s32, 3
      %p111 = por %p109, %p110
      %p112 = scmp.ne.s32.totalorder %s103, %s104
      %p113 = scmp.eq.s32.totalorder %s32, 0
      %p114 = por %p112, %p113
      %p115 = scmp.ne.s32.totalorder %s103, %s104
      %p116 = scmp.eq.s32.totalorder %s33, 3
      %p117 = por %p115, %p116
      %p119 = scmp.ne.s32.totalorder %s104, %s118
      %p120 = scmp.eq.s32.totalorder %s33, 0
      %p121 = por %p119, %p120
      %s123 = sadd.s32 %s122, 1
      %p126 = scmp.eq.s32.totalorder %s27, 3
      %p127 = scmp.ne.s32.totalorder %s122, %s124
      %p128 = scmp.eq.s32.totalorder %s27, 0
      %p129 = por %p127, %p128
      %p130 = scmp.ne.s32.totalorder %s122, %s124
      %p131 = scmp.eq.s32.totalorder %s32, 3
      %p132 = por %p130, %p131
      %p133 = scmp.ne.s32.totalorder %s124, %s125
      %p134 = scmp.eq.s32.totalorder %s32, 0
      %p135 = por %p133, %p134
      %p136 = scmp.ne.s32.totalorder %s124, %s125
      %p137 = scmp.eq.s32.totalorder %s33, 3
      %p138 = por %p136, %p137
      %p140 = scmp.ne.s32.totalorder %s125, %s139
      %p141 = scmp.eq.s32.totalorder %s33, 0
      %p142 = por %p140, %p141
      %s144 = sadd.s32 %s143, 1
      %p147 = scmp.eq.s32.totalorder %s27, 3
      %p148 = scmp.ne.s32.totalorder %s143, %s145
      %p149 = scmp.eq.s32.totalorder %s27, 0
      %p150 = por %p148, %p149
      %p151 = scmp.ne.s32.totalorder %s143, %s145
      %p152 = scmp.eq.s32.totalorder %s32, 3
      %p153 = por %p151, %p152
      %p154 = scmp.ne.s32.totalorder %s145, %s146
      %p155 = scmp.eq.s32.totalorder %s32, 0
      %p156 = por %p154, %p155
      %p157 = scmp.ne.s32.totalorder %s145, %s146
      %p158 = scmp.eq.s32.totalorder %s33, 3
      %p159 = por %p157, %p158
      %p161 = scmp.ne.s32.totalorder %s146, %s160
      %p162 = scmp.eq.s32.totalorder %s33, 0
      %p163 = por %p161, %p162
      %s164 = ssub.s32 %s34, %s46
      %s165 = ssub.s32 %s35, %s42
      %s166 = sor.u32 %s164, %s165
      %p167 = scmp.eq.s32.totalorder %s166, 0
      %s169 = sadd.s32 %s168, 1
      %s170 = scalar_select %p167, %s168, %s169
      %p173 = pneg %p167
      %p174 = scmp.eq.s32.totalorder %s27, 3
      %p175 = por %p173, %p174
      %p176 = scmp.ne.s32.totalorder %s168, %s171
      %p177 = scmp.eq.s32.totalorder %s27, 0
      %p178 = por %p176, %p177
      %p179 = scmp.ne.s32.totalorder %s168, %s171
      %p180 = scmp.eq.s32.totalorder %s32, 3
      %p181 = por %p179, %p180
      %p182 = scmp.ne.s32.totalorder %s171, %s172
      %p183 = scmp.eq.s32.totalorder %s32, 0
      %p184 = por %p182, %p183
      %p185 = scmp.ne.s32.totalorder %s171, %s172
      %p186 = scmp.eq.s32.totalorder %s33, 3
      %p187 = por %p185, %p186
      %p189 = scmp.ne.s32.totalorder %s172, %s188
      %p190 = scmp.eq.s32.totalorder %s33, 0
      %p191 = por %p189, %p190
      %p192 = scmp.le.s32.totalorder 1, %s27
      %p193 = scmp.lt.s32.totalorder %s27, 5
      %p194 = pnand %p192, %p193
      %p195 = pneg %p194
      // Predicated region
      $region9: #{tpu_custom_call.1} parent=5 // pred_check
        _
      $region10: #{tpu_custom_call.1} parent=5 // pred_check_branch
        %197 = sbr.rel (%p194) target = $region12
      $region11: #{tpu_custom_call.1} parent=5 // pred_region
        %s198 = ssub.s32 %s27, 1
        // Predicated region
        $region13: #{tpu_custom_call.1} parent=11 // pred_check
          %p199 = pneg %p114
        $region14: #{tpu_custom_call.1} parent=11 // pred_check_branch
          %201 = sbr.rel (%p199) target = $region16
        $region15: #{tpu_custom_call.1} parent=11 // pred_region
          _
        $region16: #{tpu_custom_call.1} parent=11 // pred_fallthru
          _
        // Predicated region
        $region17: #{tpu_custom_call.1} parent=11 // pred_check
          %p202 = pneg %p135
        $region18: #{tpu_custom_call.1} parent=11 // pred_check_branch
          %204 = sbr.rel (%p202) target = $region20
        $region19: #{tpu_custom_call.1} parent=11 // pred_region
          _
        $region20: #{tpu_custom_call.1} parent=11 // pred_fallthru
          _
        // Predicated region
        $region21: #{tpu_custom_call.1} parent=11 // pred_check
          %p205 = pneg %p156
        $region22: #{tpu_custom_call.1} parent=11 // pred_check_branch
          %207 = sbr.rel (%p205) target = $region24
        $region23: #{tpu_custom_call.1} parent=11 // pred_region
          _
        $region24: #{tpu_custom_call.1} parent=11 // pred_fallthru
          _
      $region12: #{tpu_custom_call.1} parent=5 // pred_fallthru
        _
      %p208 = scmp.lt.s32.totalorder %s27, 4
      // Predicated region
      $region25: #{tpu_custom_call.1} parent=5 // pred_check
        %p209 = pneg %p208
      $region26: #{tpu_custom_call.1} parent=5 // pred_check_branch
        %211 = sbr.rel (%p209) target = $region28
      $region27: #{tpu_custom_call.1} parent=5 // pred_region
        // Predicated region
        $region29: #{tpu_custom_call.1} parent=27 // pred_check
          %p212 = pneg %p59
        $region30: #{tpu_custom_call.1} parent=27 // pred_check_branch
          %214 = sbr.rel (%p212) target = $region32
        $region31: #{tpu_custom_call.1} parent=27 // pred_region
          %s215 = sand.u32 %s49, 1
          %s216 = scalar_lea.sflag [#allocation7], %s215
          %s217 = sand.u32 %s49, 1
          %s218 = smul.addr %s217, 8
          %s219 = scalar_lea.vmem [#allocation6], %s218
          %221 = vsyncadd %s216, 0
          %s222 = smul.addr %s35, 8
          %s223 = scalar_lea.hbm %s2, %s222
          %s225 = sshll.u32 %s223, 4
          %s226 = int_to_ptr.hbm [resolvable:$true] %s225
          %s227 = sshll.u32 %s219, 4
          %s228 = int_to_ptr.vmem [resolvable:$true] %s227
          %230 = dma.hbm_to_vmem [thread:$0]  %s226, 128, %s228, %s216
        $region32: #{tpu_custom_call.1} parent=27 // pred_fallthru
          _
        // Predicated region
        $region33: #{tpu_custom_call.1} parent=27 // pred_check
          %p231 = pneg %p87
        $region34: #{tpu_custom_call.1} parent=27 // pred_check_branch
          %233 = sbr.rel (%p231) target = $region36
        $region35: #{tpu_custom_call.1} parent=27 // pred_region
          %p234 = scmp.lt.s32.totalorder %s34, 1
          %s235 = scalar_select %p234, %s34, 1
          %p236 = scmp.lt.s32.totalorder %s35, 1
          %s237 = scalar_select %p236, %s35, 1
          %s238 = smul.addr %s235, 2
          %s239 = sadd.s32 %s237, %s238
          %s240 = smul.addr %s239, 8
          %s241 = scalar_lea.vmem %s3, %s240
        $region36: #{tpu_custom_call.1} parent=27 // pred_fallthru
          _
      $region28: #{tpu_custom_call.1} parent=5 // pred_fallthru
        _
      %p242 = scmp.le.s32.totalorder 1, %s27
      %p243 = scmp.lt.s32.totalorder %s27, 5
      %p244 = pnand %p242, %p243
      %p245 = pneg %p244
      // Predicated region
      $region37: #{tpu_custom_call.1} parent=5 // pred_check
        _
      $region38: #{tpu_custom_call.1} parent=5 // pred_check_branch
        %247 = sbr.rel (%p244) target = $region40
      $region39: #{tpu_custom_call.1} parent=5 // pred_region
        %s248 = ssub.s32 %s27, 1
        %s249 = sand.u32 %s52, 1
        %s250 = scalar_lea.sflag [#allocation7], %s249
        %s251 = sand.u32 %s52, 1
        %s252 = smul.addr %s251, 8
        %s253 = scalar_lea.vmem [#allocation6], %s252
        // Predicated region
        $region41: #{tpu_custom_call.1} parent=39 // pred_check
          %p254 = pneg %p65
        $region42: #{tpu_custom_call.1} parent=39 // pred_check_branch
          %256 = sbr.rel (%p254) target = $region44
        $region43: #{tpu_custom_call.1} parent=39 // pred_region
          %258 = dma.done %s250, 128
        $region44: #{tpu_custom_call.1} parent=39 // pred_fallthru
          _
        %s259 = sand.u32 %s52, 1
        %s260 = scalar_lea.sflag [#allocation7], %s259
        %s261 = sand.u32 %s52, 1
        %s262 = smul.addr %s261, 8
        %s263 = scalar_lea.vmem [#allocation6], %s262
        %p264 = pneg %p65
        %p265 = pneg %p62
        %p266 = scmp.lt.s32.totalorder %s36, 1
        %s267 = scalar_select %p266, %s36, 1
        %p268 = scmp.lt.s32.totalorder %s37, 1
        %s269 = scalar_select %p268, %s37, 1
        %s270 = smul.addr %s267, 2
        %s271 = sadd.s32 %s269, %s270
        %s272 = smul.addr %s271, 8
        %s273 = scalar_lea.vmem %s3, %s272
        %p274 = pneg %p93
        %p275 = pneg %p90
        %p276 = pneg %p114
        %p277 = pneg %p111
        %p278 = pneg %p135
        %p279 = pneg %p132
        %p280 = pneg %p156
        %p281 = pneg %p153
        %p282 = pneg %p184
        %p283 = pneg %p181
        %s284 = sand.u32 %s171, 1
        %s285 = scalar_lea.sflag [#allocation8], %s284
        %s286 = sand.u32 %s171, 1
        %s287 = smul.addr %s286, 8
        %s288 = scalar_lea.vmem [#allocation9], %s287
        %p289 = scmp.lt.s32.totalorder %s36, 1
        %s290 = scalar_select %p289, %s36, 1
        %p291 = scmp.lt.s32.totalorder %s37, 1
        %s292 = scalar_select %p291, %s37, 1
        %s293 = smul.addr %s290, 2
        %s294 = sadd.s32 %s292, %s293
        %s295 = smul.addr %s294, 8
        %s296 = scalar_lea.vmem %s3, %s295
        %p297 = scmp.lt.s32.totalorder %s37, 0
        %s298 = ssub.s32 0, %s37
        %s299 = scalar_select %p297, %s298, %s37
        %s300 = sand.u32 %s299, 1
        %s301 = ssub.s32 0, %s300
        %s302 = scalar_select %p297, %s301, %s300
        %p303 = scmp.ne.s32.totalorder %s302, 0
        %p304 = scmp.lt.s32.totalorder %s302, 0
        %p305 = pnand %p304, %p303
        %p306 = pneg %p305
        %s307 = sadd.s32 %s302, 2
        %s308 = scalar_select %p306, %s307, %s302
        %p309 = scmp.eq.s32.totalorder %s37, 0
        // Predicated region
        $region45: #{tpu_custom_call.1} parent=39 // pred_check
          %p310 = pneg %p309
        $region46: #{tpu_custom_call.1} parent=39 // pred_check_branch
          %312 = sbr.rel (%p310) target = $region48
        $region47: #{tpu_custom_call.1} parent=39 // pred_region
          %s313 = smul.u32 %s36, 16
          loop: start=0, step=1, limit=8
          $region49: #{tpu_custom_call.1} parent=47 // loop_pre_header
            _
          $region50: #{tpu_custom_call.1} parent=47 // loop_header
            %s315 = sphi 0, %s319
            %p316 = scmp.ge.s32.totalorder %s315, 8
          $region51: #{tpu_custom_call.1} parent=47 // loop_header_branch
            %318 = sbr.rel (%p316) target = $region55
          $region52: #{tpu_custom_call.1} parent=47 // loop_body
            %s320 = sadd.s32 %s313, %s315
            %s321 = sld [smem:[#allocation5 + %s320]]
            %s322 = scalar_lea.hbm %s1, %s321
            %s323 = scalar_lea.vmem [#allocation2], %s315
            %s324 = scalar_lea.sflag [#allocation3], %s315
            // Predicated region
            $region56: #{tpu_custom_call.1} parent=52 // pred_check
              _
            $region57: #{tpu_custom_call.1} parent=52 // pred_check_branch
              %326 = sbr.rel target = $region59
            $region58: #{tpu_custom_call.1} parent=52 // pred_region
              %327 = sst [smem:[#allocation12]] [#allocation11]
              %328 = sst [smem:[#allocation13]] [#allocation10]
            $region59: #{tpu_custom_call.1} parent=52 // pred_fallthru
              _
            %330 = shalt.err (0)
            %s332 = sshll.u32 %s322, 4
            %s333 = int_to_ptr.hbm [resolvable:$true] %s332
            %s334 = sshll.u32 %s323, 4
            %s335 = int_to_ptr.vmem [resolvable:$true] %s334
            %337 = dma.hbm_to_vmem [thread:$0]  %s333, 16, %s335, %s324
          $region53: #{tpu_custom_call.1} parent=47 // loop_footer
            %s319 = sadd.s32 1, %s315
          $region54: #{tpu_custom_call.1} parent=47 // loop_footer_branch
            %314 = sbr.rel target = $region50
          $region55: #{tpu_custom_call.1} parent=47 // loop_exit
            _
        $region48: #{tpu_custom_call.1} parent=39 // pred_fallthru
          _
        %s338 = sadd.s32 %s37, 1
        %p339 = scmp.lt.s32.totalorder %s338, 2
        // Predicated region
        $region60: #{tpu_custom_call.1} parent=39 // pred_check
          %p340 = pneg %p339
        $region61: #{tpu_custom_call.1} parent=39 // pred_check_branch
          %342 = sbr.rel (%p340) target = $region63
        $region62: #{tpu_custom_call.1} parent=39 // pred_region
          %s343 = ssub.s32 1, %s308
          %s344 = smul.u32 %s36, 16
          %s345 = smul.u32 %s338, 8
          %s346 = sadd.s32 %s344, %s345
          loop: start=0, step=1, limit=8
          $region64: #{tpu_custom_call.1} parent=62 // loop_pre_header
            _
          $region65: #{tpu_custom_call.1} parent=62 // loop_header
            %s348 = sphi 0, %s352
            %p349 = scmp.ge.s32.totalorder %s348, 8
          $region66: #{tpu_custom_call.1} parent=62 // loop_header_branch
            %351 = sbr.rel (%p349) target = $region70
          $region67: #{tpu_custom_call.1} parent=62 // loop_body
            %s353 = sadd.s32 %s346, %s348
            %s354 = sld [smem:[#allocation5 + %s353]]
            %s355 = scalar_lea.hbm %s1, %s354
            %s356 = smul.u32 %s343, 8
            %s357 = sadd.s32 %s348, %s356
            %s358 = scalar_lea.vmem [#allocation2], %s357
            %s359 = scalar_lea.sflag [#allocation3], %s357
            // Predicated region
            $region71: #{tpu_custom_call.1} parent=67 // pred_check
              _
            $region72: #{tpu_custom_call.1} parent=67 // pred_check_branch
              %361 = sbr.rel target = $region74
            $region73: #{tpu_custom_call.1} parent=67 // pred_region
              %362 = sst [smem:[#allocation12]] [#allocation15]
              %363 = sst [smem:[#allocation13]] [#allocation14]
            $region74: #{tpu_custom_call.1} parent=67 // pred_fallthru
              _
            %365 = shalt.err (0)
            %s367 = sshll.u32 %s355, 4
            %s368 = int_to_ptr.hbm [resolvable:$true] %s367
            %s369 = sshll.u32 %s358, 4
            %s370 = int_to_ptr.vmem [resolvable:$true] %s369
            %372 = dma.hbm_to_vmem [thread:$0]  %s368, 16, %s370, %s359
          $region68: #{tpu_custom_call.1} parent=62 // loop_footer
            %s352 = sadd.s32 1, %s348
          $region69: #{tpu_custom_call.1} parent=62 // loop_footer_branch
            %347 = sbr.rel target = $region65
          $region70: #{tpu_custom_call.1} parent=62 // loop_exit
            _
        $region63: #{tpu_custom_call.1} parent=39 // pred_fallthru
          _
        loop: start=0, step=1, limit=8
        $region75: #{tpu_custom_call.1} parent=39 // loop_pre_header
          _
        $region76: #{tpu_custom_call.1} parent=39 // loop_header
          %s374 = sphi 0, %s378
          %p375 = scmp.ge.s32.totalorder %s374, 8
        $region77: #{tpu_custom_call.1} parent=39 // loop_header_branch
          %377 = sbr.rel (%p375) target = $region81
        $region78: #{tpu_custom_call.1} parent=39 // loop_body
          %s379 = smul.u32 %s308, 8
          %s380 = sadd.s32 %s374, %s379
          %s381 = scalar_lea.sflag [#allocation3], %s380
          %383 = dma.done %s381, 16
        $region79: #{tpu_custom_call.1} parent=39 // loop_footer
          %s378 = sadd.s32 1, %s374
        $region80: #{tpu_custom_call.1} parent=39 // loop_footer_branch
          %373 = sbr.rel target = $region76
        $region81: #{tpu_custom_call.1} parent=39 // loop_exit
          _
        %v384 = vld [vmem:[%s296] sm:$0xff]
        %v385 = vld [vmem:[%s4] sm:$0x3]
        %vm386 = vcmp.eq.s32.totalorder %v384, 0
        %v387 = vsel %vm386, 1, 0
        %v388 = vcvt.s32.f32 %v387
        %390 = vset.pattern.permute.xlu0 0
        %391 = vperm.xlu0 %390, %v388
        %v392 = vpop.permute.xlu0 %391
        %v394 = vperm.slane %v385, 0
        %v395 = vmul.f32 %v392, %v394
        %vm396 = vcmp.eq.s32.totalorder %v384, 1
        %v397 = vsel %vm396, 1, 0
        %v398 = vcvt.s32.f32 %v397
        %400 = vset.pattern.permute.xlu0 0
        %401 = vperm.xlu0 %400, %v398
        %v402 = vpop.permute.xlu0 %401
        %v404 = vperm.slane %v385, 1
        %v405 = vmul.f32 %v402, %v404
        %v406 = vadd.f32 %v395, %v405
        %s407 = smul.u32 %s308, 8
        %s408 = scalar_lea.vmem [#allocation2], %s407
        %v409 = vld [vmem:[%s408] sm:$0xff]
        %v410 = vld [vmem:[%s253] sm:$0xff]
        %v411 = vadd.f32 %v409, %v410
        %v412 = vadd.f32 %v411, %v406
        %v413 = vld [vmem:[%s5] sm:$0x1]
        %v414 = vld [vmem:[%s6] sm:$0x1]
        %415 = vadd.xlane.f32.xlu0 %v412
        %v416 = vpop.xlane.xlu0 %415
        %v417 = vrcp.pop 128.0
        %v418 = vmul.f32 128.0, %v417
        %v419 = vsub.f32 1.0, %v418
        %v420 = vmul.f32 %v417, %v419
        %v421 = vadd.f32 %v417, %v420
        %vm422 = vweird.f32 %v417
        %v423 = vsel %vm422, %v417, %v421
        %v424 = vmul.f32 %v416, %v423
        %v425 = vsub.f32 %v412, %v424
        %v426 = vmul.f32 %v425, %v425
        %427 = vadd.xlane.f32.xlu0 %v426
        %v428 = vpop.xlane.xlu0 %427
        %v429 = vmul.f32 %v428, %v423
        %v430 = vadd.f32 %v429, 1e-07
        %v431 = vrsqrt.pop %v430
        %v432 = vmul.f32 %v431, %v430
        %v433 = vmul.f32 %v432, %v431
        %v434 = vmul.f32 0.5, %v433
        %v435 = vsub.f32 1.5, %v434
        %v436 = vmul.f32 %v431, %v435
        %vm437 = vweird.f32 %v430
        %vm438 = vweird.f32 %v431
        %vm439 = vmor %vm437, %vm438
        %v440 = vsel %vm439, %v431, %v436
        %v441 = vmul.f32 %v425, %v440
        %v443 = vperm.slane %v413, 0
        %v445 = vmul.f32 %v443, %v441
        %v447 = vperm.slane %v414, 0
        %v449 = vadd.f32 %v445, %v447
        %450 = vst [vmem:[%s288] sm:$0xff] %v449
        %s451 = sand.u32 %s171, 1
        %s452 = scalar_lea.sflag [#allocation8], %s451
        %s453 = sand.u32 %s171, 1
        %s454 = smul.addr %s453, 8
        %s455 = scalar_lea.vmem [#allocation9], %s454
        // Predicated region
        $region82: #{tpu_custom_call.1} parent=39 // pred_check
          %p456 = pneg %p181
        $region83: #{tpu_custom_call.1} parent=39 // pred_check_branch
          %458 = sbr.rel (%p456) target = $region85
        $region84: #{tpu_custom_call.1} parent=39 // pred_region
          %460 = vsyncadd %s452, 0
          %s461 = smul.addr %s36, 2
          %s462 = sadd.s32 %s37, %s461
          %s463 = smul.addr %s462, 8
          %s464 = scalar_lea.hbm %s7, %s463
          %s466 = sshll.u32 %s455, 4
          %s467 = int_to_ptr.vmem [resolvable:$true] %s466
          %s468 = sshll.u32 %s464, 4
          %s469 = int_to_ptr.hbm [resolvable:$true] %s468
          %471 = dma.vmem_to_hbm [thread:$0]  %s467, 128, %s469, %s452
        $region85: #{tpu_custom_call.1} parent=39 // pred_fallthru
          _
      $region40: #{tpu_custom_call.1} parent=5 // pred_fallthru
        _
      %p472 = scmp.le.s32.totalorder 2, %s27
      // Predicated region
      $region86: #{tpu_custom_call.1} parent=5 // pred_check
        %p473 = pneg %p472
      $region87: #{tpu_custom_call.1} parent=5 // pred_check_branch
        %475 = sbr.rel (%p473) target = $region89
      $region88: #{tpu_custom_call.1} parent=5 // pred_region
        %s476 = ssub.s32 %s27, 2
        // Predicated region
        $region90: #{tpu_custom_call.1} parent=88 // pred_check
          %p477 = pneg %p187
        $region91: #{tpu_custom_call.1} parent=88 // pred_check_branch
          %479 = sbr.rel (%p477) target = $region93
        $region92: #{tpu_custom_call.1} parent=88 // pred_region
          %s480 = sand.u32 %s172, 1
          %s481 = scalar_lea.sflag [#allocation8], %s480
          %s482 = sand.u32 %s172, 1
          %s483 = smul.addr %s482, 8
          %s484 = scalar_lea.vmem [#allocation9], %s483
          %486 = dma.done %s481, 128
        $region93: #{tpu_custom_call.1} parent=88 // pred_fallthru
          _
      $region89: #{tpu_custom_call.1} parent=5 // pred_fallthru
        _
    $region6: #{tpu_custom_call.1} parent=1 // loop_footer
      %s31 = sadd.s32 1, %s27
    $region7: #{tpu_custom_call.1} parent=1 // loop_footer_branch
      %26 = sbr.rel target = $region3
    $region8: #{tpu_custom_call.1} parent=1 // loop_exit
      _
    %487 = vsyncpa [#allocation7], 1
    %s488 = scalar_lea.sflag [#allocation7], 1
    %489 = vsyncpa %s488, 1
    %490 = vsyncpa [#allocation8], 1
    %s491 = scalar_lea.sflag [#allocation8], 1
    %492 = vsyncpa %s491, 1
  %493 = vsyncmov [#allocation3]
  %s494 = vpop.sfrf %493
  %p495 = scmp.eq.s32.totalorder %s494, 0
  %p496 = pneg %p495
  %498 = shalt.err (%p496)
  %s499 = scalar_lea.sflag [#allocation3], 1
  %500 = vsyncmov %s499
  %s501 = vpop.sfrf %500
  %p502 = scmp.eq.s32.totalorder %s501, 0
  %p503 = pneg %p502
  %505 = shalt.err (%p503)
  %s506 = scalar_lea.sflag [#allocation3], 2
  %507 = vsyncmov %s506
  %s508 = vpop.sfrf %507
  %p509 = scmp.eq.s32.totalorder %s508, 0
  %p510 = pneg %p509
  %512 = shalt.err (%p510)
  %s513 = scalar_lea.sflag [#allocation3], 3
  %514 = vsyncmov %s513
  %s515 = vpop.sfrf %514
  %p516 = scmp.eq.s32.totalorder %s515, 0
  %p517 = pneg %p516
  %519 = shalt.err (%p517)
  %s520 = scalar_lea.sflag [#allocation3], 4
  %521 = vsyncmov %s520
  %s522 = vpop.sfrf %521
  %p523 = scmp.eq.s32.totalorder %s522, 0
  %p524 = pneg %p523
  %526 = shalt.err (%p524)
  %s527 = scalar_lea.sflag [#allocation3], 5
  %528 = vsyncmov %s527
  %s529 = vpop.sfrf %528
  %p530 = scmp.eq.s32.totalorder %s529, 0
  %p531 = pneg %p530
  %533 = shalt.err (%p531)
  %s534 = scalar_lea.sflag [#allocation3], 6
  %535 = vsyncmov %s534
  %s536 = vpop.sfrf %535
  %p537 = scmp.eq.s32.totalorder %s536, 0
  %p538 = pneg %p537
  %540 = shalt.err (%p538)
  %s541 = scalar_lea.sflag [#allocation3], 7
  %542 = vsyncmov %s541
  %s543 = vpop.sfrf %542
  %p544 = scmp.eq.s32.totalorder %s543, 0
  %p545 = pneg %p544
  %547 = shalt.err (%p545)
  %s548 = scalar_lea.sflag [#allocation3], 8
  %549 = vsyncmov %s548
  %s550 = vpop.sfrf %549
  %p551 = scmp.eq.s32.totalorder %s550, 0
  %p552 = pneg %p551
  %554 = shalt.err (%p552)
  %s555 = scalar_lea.sflag [#allocation3], 9
  %556 = vsyncmov %s555
  %s557 = vpop.sfrf %556
  %p558 = scmp.eq.s32.totalorder %s557, 0
  %p559 = pneg %p558
  %561 = shalt.err (%p559)
  %s562 = scalar_lea.sflag [#allocation3], 10
  %563 = vsyncmov %s562
  %s564 = vpop.sfrf %563
  %p565 = scmp.eq.s32.totalorder %s564, 0
  %p566 = pneg %p565
  %568 = shalt.err (%p566)
  %s569 = scalar_lea.sflag [#allocation3], 11
  %570 = vsyncmov %s569
  %s571 = vpop.sfrf %570
  %p572 = scmp.eq.s32.totalorder %s571, 0
  %p573 = pneg %p572
  %575 = shalt.err (%p573)
  %s576 = scalar_lea.sflag [#allocation3], 12
  %577 = vsyncmov %s576
  %s578 = vpop.sfrf %577
  %p579 = scmp.eq.s32.totalorder %s578, 0
  %p580 = pneg %p579
  %582 = shalt.err (%p580)
  %s583 = scalar_lea.sflag [#allocation3], 13
  %584 = vsyncmov %s583
  %s585 = vpop.sfrf %584
  %p586 = scmp.eq.s32.totalorder %s585, 0
  %p587 = pneg %p586
  %589 = shalt.err (%p587)
  %s590 = scalar_lea.sflag [#allocation3], 14
  %591 = vsyncmov %s590
  %s592 = vpop.sfrf %591
  %p593 = scmp.eq.s32.totalorder %s592, 0
  %p594 = pneg %p593
  %596 = shalt.err (%p594)
  %s597 = scalar_lea.sflag [#allocation3], 15
  %598 = vsyncmov %s597
  %s599 = vpop.sfrf %598
  %p600 = scmp.eq.s32.totalorder %s599, 0
  %p601 = pneg %p600
  %603 = shalt.err (%p601)

</llo_original>
